<compile_context>
chip_gen: v6e
topology: v6e:2x2x1
jax: 0.10.0
libtpu: 0.0.40
codegen_flags: <defaults>
</compile_context>

<pallas_src>
import math

import jax
import jax.numpy as jnp
from jax.experimental import pallas as pl
from jax.experimental.pallas import tpu as pltpu


def _round_up(x, m):
    return ((x + m - 1) // m) * m


def gat_block(x, edge_index, w, att_src, att_dst, bias, gamma, beta,
              *, tile_n=None, k_blk=None):
    """x: [N, indim] f32; edge_index: [2, E] int32 (row0=src, row1=dst)."""
    n_real, indim = x.shape
    hidden = w.shape[1]
    hp = _round_up(hidden, 128)                 # lane-dense feature axis
    n128 = _round_up(n_real, 128)

    # Flash-style blocking keeps the per-step working set at roughly
    # tile_n*k_blk (int8 mask) + k_blk*hp (bf16 h block) + tile_n*hp f32
    # accumulator + a few T x K f32 temporaries: < 4 MiB at 512x512x128,
    # comfortably inside every generation's scoped-VMEM default.
    if tile_n is None:
        tile_n = min(512, n128)
    if k_blk is None:
        k_blk = min(512, n128)
    assert tile_n % 128 == 0 and k_blk % 128 == 0

    step = tile_n * k_blk // math.gcd(tile_n, k_blk)
    n_pad = _round_up(n_real, step)
    num_tiles = n_pad // tile_n
    num_k = n_pad // k_blk

    # ---------------- plain-JAX glue: padding + int8 adjacency mask --------
    def pad_feat(v, fill=0.0):
        return jnp.full((1, hp), fill, jnp.float32).at[0, :hidden].set(
            v.astype(jnp.float32))

    w_p = jnp.zeros((indim, hp), jnp.float32).at[:, :hidden].set(
        w.astype(jnp.float32)).astype(jnp.bfloat16)
    asrc_p = pad_feat(att_src)                          # f32, used in kernel 1
    adst_p = pad_feat(att_dst)                          # f32 VPU operand
    cbias_p = pad_feat(bias)
    gamma_p = pad_feat(gamma, 1.0)
    beta_p = pad_feat(beta)

    x_p = jnp.zeros((n_pad, indim), jnp.float32).at[:n_real, :].set(
        x.astype(jnp.float32)).astype(jnp.bfloat16)

    # int8 adjacency mask: 1 where edge (src->dst) or self-loop exists, else
    # 0.  Built directly in int8 (no f32 N^2 temp).  Self-loops on padded
    # rows keep their softmax finite; those rows are masked out of BN stats
    # and sliced away at the end.
    src, dst = edge_index[0], edge_index[1]
    diag = jnp.arange(n_pad, dtype=jnp.int32)
    mask = (jnp.zeros((n_pad, n_pad), jnp.int8)
            .at[dst, src].set(1)
            .at[diag, diag].set(1))

    parallel = pltpu.CompilerParams(dimension_semantics=("parallel",))

    # ---------------- kernel 1: h = x @ W  and  a_src = <h, att_src> -------
    def proj_kernel(x_ref, w_ref, asrc_ref, h_ref, asrc_out_ref):
        hf = jnp.dot(x_ref[...], w_ref[...],
                     preferred_element_type=jnp.float32)          # [T, Hp] f32
        h_ref[...] = hf.astype(jnp.bfloat16)
        # [1, T] source-attention row straight from the MXU (no transpose).
        asrc_out_ref[...] = jax.lax.dot_general(
            asrc_ref[...], hf,
            dimension_numbers=(((1,), (1,)), ((), ())),
            preferred_element_type=jnp.float32)

    h, a_src_row = pl.pallas_call(
        proj_kernel,
        out_shape=(jax.ShapeDtypeStruct((n_pad, hp), jnp.bfloat16),
                   jax.ShapeDtypeStruct((1, n_pad), jnp.float32)),
        grid=(num_tiles,),
        in_specs=[pl.BlockSpec((tile_n, indim), lambda i: (i, 0)),
                  pl.BlockSpec((indim, hp), lambda i: (0, 0)),
                  pl.BlockSpec((1, hp), lambda i: (0, 0))],
        out_specs=(pl.BlockSpec((tile_n, hp), lambda i: (i, 0)),
                   pl.BlockSpec((1, tile_n), lambda i: (0, i))),
        compiler_params=parallel,
    )(x_p, w_p, asrc_p)

    # ------- kernel 2: flash-style attention + aggregate + ReLU + BN stats -
    def attn_kernel(h_dst_ref, h_src_ref, asrc_ref, adst_ref, cbias_ref,
                    mask_ref, out_ref, stats_ref,
                    adst_sc, m_sc, l_sc, acc_sc):
        i = pl.program_id(0)
        k = pl.program_id(1)

        @pl.when(k == 0)
        def _():
            h_dst = h_dst_ref[...].astype(jnp.float32)
            adst_sc[...] = jnp.sum(h_dst * adst_ref[...], axis=-1,
                                   keepdims=True)                  # [T, 1]
            m_sc[...] = jnp.full_like(m_sc, -jnp.inf)
            l_sc[...] = jnp.zeros_like(l_sc)
            acc_sc[...] = jnp.zeros_like(acc_sc)

        # Logits for this (dest tile, source block): LeakyReLU(0.2) then mask.
        e = adst_sc[...] + asrc_ref[...]                           # [T, K]
        e = jnp.maximum(e, 0.2 * e)
        e = jnp.where(mask_ref[...] != 0, e, -1e30)

        # Online softmax update (every row eventually sees its finite
        # self-loop, so fully-masked partial blocks are wiped by alpha=0).
        m_new = jnp.maximum(m_sc[...], jnp.max(e, axis=-1, keepdims=True))
        alpha = jnp.exp(m_sc[...] - m_new)
        p = jnp.exp(e - m_new)
        l_sc[...] = alpha * l_sc[...] + jnp.sum(p, axis=-1, keepdims=True)
        acc_sc[...] = alpha * acc_sc[...] + jnp.dot(
            p.astype(jnp.bfloat16), h_src_ref[...],
            preferred_element_type=jnp.float32)
        m_sc[...] = m_new

        @pl.when(k == pl.num_programs(1) - 1)
        def _():
            out = acc_sc[...] / l_sc[...]                          # exact
            out = jnp.maximum(out + cbias_ref[...], 0.0)           # + bias,ReLU
            out_ref[...] = out.astype(out_ref.dtype)

            # Partial BatchNorm stats over *valid* (non-padded) rows only.
            gidx = i * tile_n + jax.lax.broadcasted_iota(
                jnp.int32, (tile_n, 1), 0)
            valid = (gidx < n_real).astype(jnp.float32)
            vout = out * valid
            stats_ref[0:1, :] = jnp.sum(vout, axis=0, keepdims=True)
            stats_ref[1:2, :] = jnp.sum(vout * out, axis=0, keepdims=True)
            stats_ref[2:8, :] = jnp.zeros((6, hp), jnp.float32)

    pre_bn, stats = pl.pallas_call(
        attn_kernel,
        out_shape=(jax.ShapeDtypeStruct((n_pad, hp), jnp.bfloat16),
                   jax.ShapeDtypeStruct((num_tiles * 8, hp), jnp.float32)),
        grid=(num_tiles, num_k),
        in_specs=[pl.BlockSpec((tile_n, hp), lambda i, k: (i, 0)),   # h (dst)
                  pl.BlockSpec((k_blk, hp), lambda i, k: (k, 0)),    # h (src)
                  pl.BlockSpec((1, k_blk), lambda i, k: (0, k)),     # a_src
                  pl.BlockSpec((1, hp), lambda i, k: (0, 0)),        # att_dst
                  pl.BlockSpec((1, hp), lambda i, k: (0, 0)),        # conv bias
                  pl.BlockSpec((tile_n, k_blk), lambda i, k: (i, k))],  # mask
        out_specs=(pl.BlockSpec((tile_n, hp), lambda i, k: (i, 0)),
                   pl.BlockSpec((8, hp), lambda i, k: (i, 0))),
        scratch_shapes=[pltpu.VMEM((tile_n, 1), jnp.float32),   # a_dst
                        pltpu.VMEM((tile_n, 1), jnp.float32),   # running max
                        pltpu.VMEM((tile_n, 1), jnp.float32),   # running denom
                        pltpu.VMEM((tile_n, hp), jnp.float32)],  # attn@h acc
        compiler_params=pltpu.CompilerParams(
            dimension_semantics=("parallel", "arbitrary")),
    )(h, h, a_src_row, adst_p, cbias_p, mask)

    # Tiny cross-tile stat reduction (num_tiles x Hp) in plain JAX.
    st = stats.reshape(num_tiles, 8, hp)
    s1 = jnp.sum(st[:, 0, :], axis=0, keepdims=True)   # [1, Hp] sum
    s2 = jnp.sum(st[:, 1, :], axis=0, keepdims=True)   # [1, Hp] sum of squares

    # ---------------- kernel 3: BatchNorm1d normalize (global stats) -------
    inv_n = 1.0 / float(n_real)

    def bn_kernel(y_ref, s1_ref, s2_ref, gamma_ref, beta_ref, o_ref):
        mean = s1_ref[...] * inv_n
        var = jnp.maximum(s2_ref[...] * inv_n - mean * mean, 0.0)  # biased var
        scale = jax.lax.rsqrt(var + 1e-5) * gamma_ref[...]
        y = y_ref[...].astype(jnp.float32)
        o_ref[...] = (y - mean) * scale + beta_ref[...]

    out = pl.pallas_call(
        bn_kernel,
        out_shape=jax.ShapeDtypeStruct((n_pad, hp), jnp.float32),
        grid=(num_tiles,),
        in_specs=[pl.BlockSpec((tile_n, hp), lambda i: (i, 0)),
                  pl.BlockSpec((1, hp), lambda i: (0, 0)),
                  pl.BlockSpec((1, hp), lambda i: (0, 0)),
                  pl.BlockSpec((1, hp), lambda i: (0, 0)),
                  pl.BlockSpec((1, hp), lambda i: (0, 0))],
        out_specs=pl.BlockSpec((tile_n, hp), lambda i: (i, 0)),
        compiler_params=parallel,
    )(pre_bn, s1, s2, gamma_p, beta_p)

    return out[:n_real, :hidden]


if __name__ == "__main__":
    key = jax.random.PRNGKey(0)
    N, E, indim, hidden = 200, 800, 16, 32

    k = jax.random.split(key, 8)
    x = jax.random.normal(k[0], (N, indim), jnp.float32)
    src = jax.random.randint(k[1], (E,), 0, N, jnp.int32)
    dst = jax.random.randint(k[2], (E,), 0, N, jnp.int32)
    edge_index = jnp.stack([src, dst], axis=0)

    # GATConv params (lin weight [indim, hidden] pre-transposed, att vectors,
    # bias) + BatchNorm affine params (PyTorch init: gamma=1, beta=0).
    w = jax.random.normal(k[3], (indim, hidden), jnp.float32) * 0.1
    att_src = jax.random.normal(k[4], (hidden,), jnp.float32) * 0.1
    att_dst = jax.random.normal(k[5], (hidden,), jnp.float32) * 0.1
    bias = jax.random.normal(k[6], (hidden,), jnp.float32) * 0.01
    gamma = jnp.ones((hidden,), jnp.float32)
    beta = jnp.zeros((hidden,), jnp.float32)

    # tile_n = k_blk = 128 -> a 2x2 (row-tile x source-block) grid at this
    # small size, exercising the online-softmax K loop, the pipelined
    # multi-tile path and the two-phase BatchNorm reduction.
    out = gat_block(x, edge_index, w, att_src, att_dst, bias, gamma, beta,
                    tile_n=128, k_blk=128)
    jax.block_until_ready(out)
    assert out.shape == (N, hidden)
    assert bool(jnp.all(jnp.isfinite(out)))
    print("KERNEL_OK")
</pallas_src>

<mosaic_0001>
module attributes {stable_mosaic.version = 11 : i64} {
  func.func @proj_kernel(%arg0: i32, %arg1: memref<128x16xbf16, #tpu.memory_space<vmem>>, %arg2: memref<16x128xbf16, #tpu.memory_space<vmem>>, %arg3: memref<1x128xf32, #tpu.memory_space<vmem>>, %arg4: memref<128x128xbf16, #tpu.memory_space<vmem>>, %arg5: memref<1x128xf32, #tpu.memory_space<vmem>>) attributes {dimension_semantics = [#tpu.dimension_semantics<parallel>], iteration_bounds = array<i64: 2>, scalar_prefetch = 0 : i64, scratch_operands = 0 : i64, tpu.core_type = #tpu.core_type<tc>, window_params = [{transform_indices = @transform_0, window_bounds = array<i64: 128, 16>}, {pipeline_mode = #tpu.pipeline_mode<synchronous>, transform_indices = @transform_1, window_bounds = array<i64: 16, 128>}, {pipeline_mode = #tpu.pipeline_mode<synchronous>, transform_indices = @transform_2, window_bounds = array<i64: 1, 128>}, {transform_indices = @transform_3, window_bounds = array<i64: 128, 128>}, {transform_indices = @transform_4, window_bounds = array<i64: 1, 128>}]} {
    %c0 = arith.constant 0 : index
    %c0_0 = arith.constant 0 : index
    %0 = vector.load %arg1[%c0, %c0_0] : memref<128x16xbf16, #tpu.memory_space<vmem>>, vector<128x16xbf16>
    %c0_1 = arith.constant 0 : index
    %c0_2 = arith.constant 0 : index
    %1 = vector.load %arg2[%c0_1, %c0_2] : memref<16x128xbf16, #tpu.memory_space<vmem>>, vector<16x128xbf16>
    %cst = arith.constant dense<0.000000e+00> : vector<128x128xf32>
    %2 = tpu.matmul %0, %1, %cst {dimension_numbers = #tpu.dot_dimension_numbers<[1], [0], [0], [1], [0, 0, 1, 1], [], []>} : vector<128x16xbf16>, vector<16x128xbf16>, vector<128x128xf32> -> vector<128x128xf32>
    %3 = arith.truncf %2 : vector<128x128xf32> to vector<128x128xbf16>
    %c0_3 = arith.constant 0 : index
    %c0_4 = arith.constant 0 : index
    %4 = vector.load %arg4[%c0_3, %c0_4] : memref<128x128xbf16, #tpu.memory_space<vmem>>, vector<128x128xbf16>
    tpu.vector_store %arg4[%c0_3, %c0_4], %3 {strides = array<i32>} : memref<128x128xbf16, #tpu.memory_space<vmem>>, vector<128x128xbf16>,
    %c0_5 = arith.constant 0 : index
    %c0_6 = arith.constant 0 : index
    %5 = vector.load %arg3[%c0_5, %c0_6] : memref<1x128xf32, #tpu.memory_space<vmem>>, vector<1x128xf32>
    %cst_7 = arith.constant dense<0.000000e+00> : vector<1x128xf32>
    %6 = tpu.matmul %5, %2, %cst_7 {dimension_numbers = #tpu.dot_dimension_numbers<[1], [1], [0], [0], [0, 0, 1, 0], [], []>} : vector<1x128xf32>, vector<128x128xf32>, vector<1x128xf32> -> vector<1x128xf32>
    %c0_8 = arith.constant 0 : index
    %c0_9 = arith.constant 0 : index
    %7 = vector.load %arg5[%c0_8, %c0_9] : memref<1x128xf32, #tpu.memory_space<vmem>>, vector<1x128xf32>
    tpu.vector_store %arg5[%c0_8, %c0_9], %6 {strides = array<i32>} : memref<1x128xf32, #tpu.memory_space<vmem>>, vector<1x128xf32>,
    return
  }
  func.func @transform_0(%arg0: i32) -> (i32, i32) {
    %c0_i32 = arith.constant 0 : i32
    %c0_i32_0 = arith.constant 0 : i32
    return %arg0, %c0_i32 : i32, i32
  }
  func.func @transform_1(%arg0: i32) -> (i32, i32) {
    %c0_i32 = arith.constant 0 : i32
    %c0_i32_0 = arith.constant 0 : i32
    %c0_i32_1 = arith.constant 0 : i32
    return %c0_i32, %c0_i32_0 : i32, i32
  }
  func.func @transform_2(%arg0: i32) -> (i32, i32) {
    %c0_i32 = arith.constant 0 : i32
    %c0_i32_0 = arith.constant 0 : i32
    %c0_i32_1 = arith.constant 0 : i32
    return %c0_i32, %c0_i32_0 : i32, i32
  }
  func.func @transform_3(%arg0: i32) -> (i32, i32) {
    %c0_i32 = arith.constant 0 : i32
    %c0_i32_0 = arith.constant 0 : i32
    return %arg0, %c0_i32 : i32, i32
  }
  func.func @transform_4(%arg0: i32) -> (i32, i32) {
    %c0_i32 = arith.constant 0 : i32
    %c0_i32_0 = arith.constant 0 : i32
    return %c0_i32, %arg0 : i32, i32
  }
}

</mosaic_0001>

<llo_original>
// kernel: tpu_custom_call.1
$region0: #{tpu_custom_call.1}
  #allocation0 [shape = 'u32[]', space=smem, size = 0x4, offset = 0x4, fixed_abs, tag = 'smem constant byte address 0x4 - core index']
  #allocation1 [shape = 'u32[144,128]{1,0:T(1,128)}', space=vmem, size = 0x12000, scoped, tag = 'internal scratch']
  %s0 = inlined_call_operand.vmem [shape: bf16[256,16], index: 0, kind: input, shape index: {}]
  %s1 = inlined_call_operand.vmem [shape: bf16[16,128], index: 1, kind: input, shape index: {}]
  %s2 = inlined_call_operand.vmem [shape: f32[1,128], index: 2, kind: input, shape index: {}]
  %s3 = inlined_call_operand.hbm [shape: bf16[256,128], index: 3, kind: output, shape index: {0}]
  %s4 = inlined_call_operand.hbm [shape: f32[1,256], index: 4, kind: output, shape index: {1}]
  %5 = xla_tuple %s3, %s4
  %s6 = sld [smem:[#allocation0]]
  $region53: #{tpu_custom_call.1} parent=0
    _
  %s8 = ssub.s32 1, %s6
  %s9 = scalar_select 0, %s8, %s6
  $region1: #{tpu_custom_call.1} parent=0
    #allocation2 [shape = 'u8[65536]{0}', space=vmem, size = 0x10000, scoped, tag = 'output window, operand 0']
    #allocation3 [shape = 's32[2]{0}', space=sflag, size = 0x8, scoped, tag = 'scoped memory for tpu_custom_call.1']
    #allocation4 [shape = 'u8[1024]{0}', space=vmem, size = 0x400, scoped, tag = 'output window, operand 1']
    #allocation5 [shape = 's32[2]{0}', space=sflag, size = 0x8, scoped, tag = 'scoped memory for tpu_custom_call.1']
    %10 = vsyncpa [#allocation3], 0
    %s11 = scalar_lea.sflag [#allocation3], 1
    %12 = vsyncpa %s11, 0
    %13 = vsyncpa [#allocation5], 0
    %s14 = scalar_lea.sflag [#allocation5], 1
    %15 = vsyncpa %s14, 0
    loop: start=0, step=1, limit=4
    $region2: #{tpu_custom_call.1} parent=1 // loop_pre_header
      _
    $region3: #{tpu_custom_call.1} parent=1 // loop_header
      %s17 = sphi 0, %s21
      %p18 = scmp.ge.s32.totalorder %s17, 4
      %s27 = sphi 0, %s29
      %s30 = sphi 0, %s27
      %s31 = sphi 0, %s30
      %s47 = sphi 0, %s31
      %s51 = sphi 0, %s51
      %s53 = sphi 0, %s51
      %s54 = sphi 0, %s53
      %s68 = sphi 0, %s54
      %s72 = sphi 0, %s72
      %s74 = sphi 0, %s72
      %s75 = sphi 0, %s74
      %s89 = sphi 0, %s75
      %s95 = sphi 0, %s97
      %s98 = sphi 0, %s95
      %s99 = sphi 0, %s98
      %s115 = sphi 0, %s99
      %s121 = sphi 0, %s123
      %s124 = sphi 0, %s121
      %s125 = sphi 0, %s124
      %s141 = sphi 0, %s125
    $region4: #{tpu_custom_call.1} parent=1 // loop_header_branch
      %20 = sbr.rel (%p18) target = $region8
    $region5: #{tpu_custom_call.1} parent=1 // loop_body
      %s22 = ssub.s32 %s17, 1
      %s23 = ssub.s32 %s17, 2
      %s24 = sadd.s32 %s17, 1
      %s25 = ssub.s32 %s17, %s24
      %p26 = scmp.eq.s32.totalorder %s25, 0
      %s28 = sadd.s32 %s27, 1
      %s29 = scalar_select %p26, %s27, %s28
      %p32 = pneg %p26
      %p33 = scmp.eq.s32.totalorder %s17, 1
      %p34 = por %p32, %p33
      %p35 = scmp.ne.s32.totalorder %s27, %s30
      %p36 = scmp.eq.s32.totalorder %s17, 0
      %p37 = por %p35, %p36
      %p38 = scmp.ne.s32.totalorder %s27, %s30
      %p39 = scmp.eq.s32.totalorder %s22, 1
      %p40 = por %p38, %p39
      %p41 = scmp.ne.s32.totalorder %s30, %s31
      %p42 = scmp.eq.s32.totalorder %s22, 0
      %p43 = por %p41, %p42
      %p44 = scmp.ne.s32.totalorder %s30, %s31
      %p45 = scmp.eq.s32.totalorder %s23, 1
      %p46 = por %p44, %p45
      %p48 = scmp.ne.s32.totalorder %s31, %s47
      %p49 = scmp.eq.s32.totalorder %s23, 0
      %p50 = por %p48, %p49
      %s52 = sadd.s32 %s51, 1
      %p55 = scmp.eq.s32.totalorder %s17, 1
      %p56 = scmp.ne.s32.totalorder %s51, %s53
      %p57 = scmp.eq.s32.totalorder %s17, 0
      %p58 = por %p56, %p57
      %p59 = scmp.ne.s32.totalorder %s51, %s53
      %p60 = scmp.eq.s32.totalorder %s22, 1
      %p61 = por %p59, %p60
      %p62 = scmp.ne.s32.totalorder %s53, %s54
      %p63 = scmp.eq.s32.totalorder %s22, 0
      %p64 = por %p62, %p63
      %p65 = scmp.ne.s32.totalorder %s53, %s54
      %p66 = scmp.eq.s32.totalorder %s23, 1
      %p67 = por %p65, %p66
      %p69 = scmp.ne.s32.totalorder %s54, %s68
      %p70 = scmp.eq.s32.totalorder %s23, 0
      %p71 = por %p69, %p70
      %s73 = sadd.s32 %s72, 1
      %p76 = scmp.eq.s32.totalorder %s17, 1
      %p77 = scmp.ne.s32.totalorder %s72, %s74
      %p78 = scmp.eq.s32.totalorder %s17, 0
      %p79 = por %p77, %p78
      %p80 = scmp.ne.s32.totalorder %s72, %s74
      %p81 = scmp.eq.s32.totalorder %s22, 1
      %p82 = por %p80, %p81
      %p83 = scmp.ne.s32.totalorder %s74, %s75
      %p84 = scmp.eq.s32.totalorder %s22, 0
      %p85 = por %p83, %p84
      %p86 = scmp.ne.s32.totalorder %s74, %s75
      %p87 = scmp.eq.s32.totalorder %s23, 1
      %p88 = por %p86, %p87
      %p90 = scmp.ne.s32.totalorder %s75, %s89
      %p91 = scmp.eq.s32.totalorder %s23, 0
      %p92 = por %p90, %p91
      %s93 = ssub.s32 %s17, %s24
      %p94 = scmp.eq.s32.totalorder %s93, 0
      %s96 = sadd.s32 %s95, 1
      %s97 = scalar_select %p94, %s95, %s96
      %p100 = pneg %p94
      %p101 = scmp.eq.s32.totalorder %s17, 1
      %p102 = por %p100, %p101
      %p103 = scmp.ne.s32.totalorder %s95, %s98
      %p104 = scmp.eq.s32.totalorder %s17, 0
      %p105 = por %p103, %p104
      %p106 = scmp.ne.s32.totalorder %s95, %s98
      %p107 = scmp.eq.s32.totalorder %s22, 1
      %p108 = por %p106, %p107
      %p109 = scmp.ne.s32.totalorder %s98, %s99
      %p110 = scmp.eq.s32.totalorder %s22, 0
      %p111 = por %p109, %p110
      %p112 = scmp.ne.s32.totalorder %s98, %s99
      %p113 = scmp.eq.s32.totalorder %s23, 1
      %p114 = por %p112, %p113
      %p116 = scmp.ne.s32.totalorder %s99, %s115
      %p117 = scmp.eq.s32.totalorder %s23, 0
      %p118 = por %p116, %p117
      %s119 = ssub.s32 %s17, %s24
      %p120 = scmp.eq.s32.totalorder %s119, 0
      %s122 = sadd.s32 %s121, 1
      %s123 = scalar_select %p120, %s121, %s122
      %p126 = pneg %p120
      %p127 = scmp.eq.s32.totalorder %s17, 1
      %p128 = por %p126, %p127
      %p129 = scmp.ne.s32.totalorder %s121, %s124
      %p130 = scmp.eq.s32.totalorder %s17, 0
      %p131 = por %p129, %p130
      %p132 = scmp.ne.s32.totalorder %s121, %s124
      %p133 = scmp.eq.s32.totalorder %s22, 1
      %p134 = por %p132, %p133
      %p135 = scmp.ne.s32.totalorder %s124, %s125
      %p136 = scmp.eq.s32.totalorder %s22, 0
      %p137 = por %p135, %p136
      %p138 = scmp.ne.s32.totalorder %s124, %s125
      %p139 = scmp.eq.s32.totalorder %s23, 1
      %p140 = por %p138, %p139
      %p142 = scmp.ne.s32.totalorder %s125, %s141
      %p143 = scmp.eq.s32.totalorder %s23, 0
      %p144 = por %p142, %p143
      %p145 = scmp.le.s32.totalorder 1, %s17
      %p146 = scmp.lt.s32.totalorder %s17, 3
      %p147 = pnand %p145, %p146
      %p148 = pneg %p147
      // Predicated region
      $region9: #{tpu_custom_call.1} parent=5 // pred_check
        _
      $region10: #{tpu_custom_call.1} parent=5 // pred_check_branch
        %150 = sbr.rel (%p147) target = $region12
      $region11: #{tpu_custom_call.1} parent=5 // pred_region
        %s151 = ssub.s32 %s17, 1
        // Predicated region
        $region13: #{tpu_custom_call.1} parent=11 // pred_check
          %p152 = pneg %p64
        $region14: #{tpu_custom_call.1} parent=11 // pred_check_branch
          %154 = sbr.rel (%p152) target = $region16
        $region15: #{tpu_custom_call.1} parent=11 // pred_region
          _
        $region16: #{tpu_custom_call.1} parent=11 // pred_fallthru
          _
        // Predicated region
        $region17: #{tpu_custom_call.1} parent=11 // pred_check
          %p155 = pneg %p85
        $region18: #{tpu_custom_call.1} parent=11 // pred_check_branch
          %157 = sbr.rel (%p155) target = $region20
        $region19: #{tpu_custom_call.1} parent=11 // pred_region
          _
        $region20: #{tpu_custom_call.1} parent=11 // pred_fallthru
          _
      $region12: #{tpu_custom_call.1} parent=5 // pred_fallthru
        _
      %p158 = scmp.lt.s32.totalorder %s17, 2
      // Predicated region
      $region21: #{tpu_custom_call.1} parent=5 // pred_check
        %p159 = pneg %p158
      $region22: #{tpu_custom_call.1} parent=5 // pred_check_branch
        %161 = sbr.rel (%p159) target = $region24
      $region23: #{tpu_custom_call.1} parent=5 // pred_region
        // Predicated region
        $region25: #{tpu_custom_call.1} parent=23 // pred_check
          %p162 = pneg %p37
        $region26: #{tpu_custom_call.1} parent=23 // pred_check_branch
          %164 = sbr.rel (%p162) target = $region28
        $region27: #{tpu_custom_call.1} parent=23 // pred_region
          %s165 = smul.u32 16, %s17
          %p166 = scmp.lt.s32.totalorder %s165, 31
          %s167 = scalar_select %p166, %s165, 31
          %s168 = smul.addr %s167, 4
          %s169 = scalar_lea.vmem %s0, %s168
          %s170 = smul.u32 16, %s17
        $region28: #{tpu_custom_call.1} parent=23 // pred_fallthru
          _
      $region24: #{tpu_custom_call.1} parent=5 // pred_fallthru
        _
      %p171 = scmp.le.s32.totalorder 1, %s17
      %p172 = scmp.lt.s32.totalorder %s17, 3
      %p173 = pnand %p171, %p172
      %p174 = pneg %p173
      // Predicated region
      $region29: #{tpu_custom_call.1} parent=5 // pred_check
        _
      $region30: #{tpu_custom_call.1} parent=5 // pred_check_branch
        %176 = sbr.rel (%p173) target = $region32
      $region31: #{tpu_custom_call.1} parent=5 // pred_region
        %s177 = ssub.s32 %s17, 1
        %s178 = smul.u32 16, %s22
        %p179 = scmp.lt.s32.totalorder %s178, 31
        %s180 = scalar_select %p179, %s178, 31
        %s181 = smul.addr %s180, 4
        %s182 = scalar_lea.vmem %s0, %s181
        %p183 = pneg %p43
        %p184 = pneg %p40
        %p185 = pneg %p64
        %p186 = pneg %p61
        %p187 = pneg %p85
        %p188 = pneg %p82
        %p189 = pneg %p111
        %p190 = pneg %p108
        %s191 = sand.u32 %s98, 1
        %s192 = scalar_lea.sflag [#allocation3], %s191
        %s193 = sand.u32 %s98, 1
        %s194 = smul.addr %s193, 64
        %s195 = scalar_lea.vmem [#allocation2], %s194
        %p196 = pneg %p137
        %p197 = pneg %p134
        %s198 = sand.u32 %s124, 1
        %s199 = scalar_lea.sflag [#allocation5], %s198
        %s200 = sand.u32 %s124, 1
        %s201 = scalar_lea.vmem [#allocation4], %s200
        %s202 = smul.u32 16, %s22
        %p203 = scmp.lt.s32.totalorder %s202, 31
        %s204 = scalar_select %p203, %s202, 31
        %s205 = smul.addr %s204, 4
        %s206 = scalar_lea.vmem %s0, %s205
        %s207 = smul.u32 16, %s22
        %s208 = smul.u32 16, %s22
        %v210 = vld [vmem:[%s206] sm:$0xf]
        %v211 = vld [vmem:[%s206 + $0x4] sm:$0xf]
        %v212 = vld [vmem:[%s206 + $0x8] sm:$0xf]
        %v213 = vld [vmem:[%s206 + $0xc] sm:$0xf]
        %v214 = vld [vmem:[%s206 + $0x10] sm:$0xf]
        %v215 = vld [vmem:[%s206 + $0x14] sm:$0xf]
        %v216 = vld [vmem:[%s206 + $0x18] sm:$0xf]
        %v217 = vld [vmem:[%s206 + $0x1c] sm:$0xf]
        %v218 = vld [vmem:[%s206 + $0x20] sm:$0xf]
        %v219 = vld [vmem:[%s206 + $0x24] sm:$0xf]
        %v220 = vld [vmem:[%s206 + $0x28] sm:$0xf]
        %v221 = vld [vmem:[%s206 + $0x2c] sm:$0xf]
        %v222 = vld [vmem:[%s206 + $0x30] sm:$0xf]
        %v223 = vld [vmem:[%s206 + $0x34] sm:$0xf]
        %v224 = vld [vmem:[%s206 + $0x38] sm:$0xf]
        %v225 = vld [vmem:[%s206 + $0x3c] sm:$0xf]
        %v226 = vld [vmem:[%s1] sm:$0xf]
        %v227 = vld [vmem:[%s1 + $0x4] sm:$0xf]
        %v244 = vunpack.c.l.b16 %v210
        %v245 = vunpack.c.l.b16 %v211
        %v246 = vunpack.c.l.b16 %v212
        %v247 = vunpack.c.l.b16 %v213
        %v248 = vunpack.c.l.b16 %v214
        %v249 = vunpack.c.l.b16 %v215
        %v250 = vunpack.c.l.b16 %v216
        %v251 = vunpack.c.l.b16 %v217
        %v252 = vunpack.c.l.b16 %v218
        %v253 = vunpack.c.l.b16 %v219
        %v254 = vunpack.c.l.b16 %v220
        %v255 = vunpack.c.l.b16 %v221
        %v256 = vunpack.c.l.b16 %v222
        %v257 = vunpack.c.l.b16 %v223
        %v258 = vunpack.c.l.b16 %v224
        %v259 = vunpack.c.l.b16 %v225
        %v260 = vpack.c.b16 %v245, %v244
        %v261 = vpack.c.b16 %v247, %v246
        %v262 = vpack.c.b16 %v249, %v248
        %v263 = vpack.c.b16 %v251, %v250
        %v264 = vpack.c.b16 %v253, %v252
        %v265 = vpack.c.b16 %v255, %v254
        %v266 = vpack.c.b16 %v257, %v256
        %v267 = vpack.c.b16 %v259, %v258
        %v270 = vunpack.c.l.b16 %v226
        %v271 = vunpack.c.l.b16 %v227
        %v272 = vpack.c.b16 %v271, %v270
        %vm274 = vcmask 130048
        %v276 = vsel %vm274, %v260, 0
        %v279 = vsel %vm274, %v261, 0
        %v282 = vsel %vm274, %v262, 0
        %v285 = vsel %vm274, %v263, 0
        %v288 = vsel %vm274, %v264, 0
        %v291 = vsel %vm274, %v265, 0
        %v294 = vsel %vm274, %v266, 0
        %v297 = vsel %vm274, %v267, 0
        %299 = vmatprep.subr.bf16.mxu0 0
        %300 = vmatpush1.bf16.msra.mxu0 0
        %301 = vmatprep.subr.bf16.mxu0 0
        %302 = vmatpush1.bf16.msra.mxu0 0
        %303 = vmatprep.subr.bf16.mxu0 0
        %304 = vmatpush1.bf16.msra.mxu0 0
        %305 = vmatprep.subr.bf16.mxu0 0
        %306 = vmatpush1.bf16.msra.mxu0 0
        %307 = vmatprep.subr.bf16.mxu0 0
        %308 = vmatpush1.bf16.msra.mxu0 0
        %309 = vmatprep.subr.bf16.mxu0 0
        %310 = vmatpush1.bf16.msra.mxu0 0
        %311 = vmatprep.subr.bf16.mxu0 0
        %312 = vmatpush1.bf16.msra.mxu0 0
        %313 = vmatprep.subr.bf16.mxu0 0
        %314 = vmatpush1.bf16.msra.mxu0 %v272
        %315 = vmatprep.subr.bf16.mxu0 0
        %316 = vmatpush2.bf16.msra.mxu0 0
        %317 = vmatprep.subr.bf16.mxu0 0
        %318 = vmatpush2.bf16.msra.mxu0 0
        %319 = vmatprep.subr.bf16.mxu0 0
        %320 = vmatpush2.bf16.msra.mxu0 0
        %321 = vmatprep.subr.bf16.mxu0 0
        %322 = vmatpush2.bf16.msra.mxu0 0
        %323 = vmatprep.subr.bf16.mxu0 0
        %324 = vmatpush2.bf16.msra.mxu0 0
        %325 = vmatprep.subr.bf16.mxu0 0
        %326 = vmatpush2.bf16.msra.mxu0 0
        %327 = vmatprep.subr.bf16.mxu0 0
        %328 = vmatpush2.bf16.msra.mxu0 0
        %329 = vmatprep.subr.bf16.mxu0 0
        %330 = vmatpush2.bf16.msra.mxu0 0
        %331 = vmatprep.mubr.bf16.mxu0 0
        %332 = vmatmul.mubr.bf16.gmra.mxu0 %v276
        %v333 = vpop.f32.mrf.mxu0
        %v334 = vadd.f32 0.0, %v333
        %v335 = vpop.f32.mrf.mxu0
        %v336 = vpop.f32.mrf.mxu0
        %v337 = vadd.f32 0.0, %v336
        %v338 = vpop.f32.mrf.mxu0
        %339 = vmatprep.mubr.bf16.mxu0 0
        %340 = vmatmul.mubr.bf16.gmra.mxu0 %v279
        %v341 = vpop.f32.mrf.mxu0
        %v342 = vadd.f32 0.0, %v341
        %v343 = vpop.f32.mrf.mxu0
        %v344 = vpop.f32.mrf.mxu0
        %v345 = vadd.f32 0.0, %v344
        %v346 = vpop.f32.mrf.mxu0
        %347 = vmatprep.mubr.bf16.mxu0 0
        %348 = vmatmul.mubr.bf16.gmra.mxu0 %v282
        %v349 = vpop.f32.mrf.mxu0
        %v350 = vadd.f32 0.0, %v349
        %v351 = vpop.f32.mrf.mxu0
        %v352 = vpop.f32.mrf.mxu0
        %v353 = vadd.f32 0.0, %v352
        %v354 = vpop.f32.mrf.mxu0
        %355 = vmatprep.mubr.bf16.mxu0 0
        %356 = vmatmul.mubr.bf16.gmra.mxu0 %v285
        %v357 = vpop.f32.mrf.mxu0
        %v358 = vadd.f32 0.0, %v357
        %v359 = vpop.f32.mrf.mxu0
        %v360 = vpop.f32.mrf.mxu0
        %v361 = vadd.f32 0.0, %v360
        %v362 = vpop.f32.mrf.mxu0
        %363 = vmatprep.mubr.bf16.mxu0 0
        %364 = vmatmul.mubr.bf16.gmra.mxu0 %v288
        %v365 = vpop.f32.mrf.mxu0
        %v366 = vadd.f32 0.0, %v365
        %v367 = vpop.f32.mrf.mxu0
        %v368 = vpop.f32.mrf.mxu0
        %v369 = vadd.f32 0.0, %v368
        %v370 = vpop.f32.mrf.mxu0
        %371 = vmatprep.mubr.bf16.mxu0 0
        %372 = vmatmul.mubr.bf16.gmra.mxu0 %v291
        %v373 = vpop.f32.mrf.mxu0
        %v374 = vadd.f32 0.0, %v373
        %v375 = vpop.f32.mrf.mxu0
        %v376 = vpop.f32.mrf.mxu0
        %v377 = vadd.f32 0.0, %v376
        %v378 = vpop.f32.mrf.mxu0
        %379 = vmatprep.mubr.bf16.mxu0 0
        %380 = vmatmul.mubr.bf16.gmra.mxu0 %v294
        %v381 = vpop.f32.mrf.mxu0
        %v382 = vadd.f32 0.0, %v381
        %v383 = vpop.f32.mrf.mxu0
        %v384 = vpop.f32.mrf.mxu0
        %v385 = vadd.f32 0.0, %v384
        %v386 = vpop.f32.mrf.mxu0
        %387 = vmatprep.mubr.bf16.mxu0 0
        %388 = vmatmul.mubr.bf16.gmra.mxu0 %v297
        %v389 = vpop.f32.mrf.mxu0
        %v390 = vadd.f32 0.0, %v389
        %v391 = vpop.f32.mrf.mxu0
        %v392 = vpop.f32.mrf.mxu0
        %v393 = vadd.f32 0.0, %v392
        %v394 = vpop.f32.mrf.mxu0
        %395 = vdwg.mxu0
        %v396 = vpack.c.bf16 %v337, %v334
        %v397 = vpack.c.bf16 %v345, %v342
        %v398 = vpack.c.bf16 %v353, %v350
        %v399 = vpack.c.bf16 %v361, %v358
        %v400 = vpack.c.bf16 %v369, %v366
        %v401 = vpack.c.bf16 %v377, %v374
        %v402 = vpack.c.bf16 %v385, %v382
        %v403 = vpack.c.bf16 %v393, %v390
        %v412 = vunpack.c.l.b16 %v396
        %v413 = vunpack.c.h.b16 %v396
        %v414 = vunpack.c.l.b16 %v397
        %v415 = vunpack.c.h.b16 %v397
        %v416 = vunpack.c.l.b16 %v398
        %v417 = vunpack.c.h.b16 %v398
        %v418 = vunpack.c.l.b16 %v399
        %v419 = vunpack.c.h.b16 %v399
        %v420 = vunpack.c.l.b16 %v400
        %v421 = vunpack.c.h.b16 %v400
        %v422 = vunpack.c.l.b16 %v401
        %v423 = vunpack.c.h.b16 %v401
        %v424 = vunpack.c.l.b16 %v402
        %v425 = vunpack.c.h.b16 %v402
        %v426 = vunpack.c.l.b16 %v403
        %v427 = vunpack.c.h.b16 %v403
        %v428 = vpack.c.b16 %v412, %v412
        %v429 = vpack.c.b16 %v413, %v413
        %v430 = vpack.c.b16 %v414, %v414
        %v431 = vpack.c.b16 %v415, %v415
        %v432 = vpack.c.b16 %v416, %v416
        %v433 = vpack.c.b16 %v417, %v417
        %v434 = vpack.c.b16 %v418, %v418
        %v435 = vpack.c.b16 %v419, %v419
        %v436 = vpack.c.b16 %v420, %v420
        %v437 = vpack.c.b16 %v421, %v421
        %v438 = vpack.c.b16 %v422, %v422
        %v439 = vpack.c.b16 %v423, %v423
        %v440 = vpack.c.b16 %v424, %v424
        %v441 = vpack.c.b16 %v425, %v425
        %v442 = vpack.c.b16 %v426, %v426
        %v443 = vpack.c.b16 %v427, %v427
        %460 = vst [vmem:[%s195] sm:$0xf] %v428
        %461 = vst [vmem:[%s195 + $0x4] sm:$0xf] %v429
        %462 = vst [vmem:[%s195 + $0x8] sm:$0xf] %v430
        %463 = vst [vmem:[%s195 + $0xc] sm:$0xf] %v431
        %464 = vst [vmem:[%s195 + $0x10] sm:$0xf] %v432
        %465 = vst [vmem:[%s195 + $0x14] sm:$0xf] %v433
        %466 = vst [vmem:[%s195 + $0x18] sm:$0xf] %v434
        %467 = vst [vmem:[%s195 + $0x1c] sm:$0xf] %v435
        %468 = vst [vmem:[%s195 + $0x20] sm:$0xf] %v436
        %469 = vst [vmem:[%s195 + $0x24] sm:$0xf] %v437
        %470 = vst [vmem:[%s195 + $0x28] sm:$0xf] %v438
        %471 = vst [vmem:[%s195 + $0x2c] sm:$0xf] %v439
        %472 = vst [vmem:[%s195 + $0x30] sm:$0xf] %v440
        %473 = vst [vmem:[%s195 + $0x34] sm:$0xf] %v441
        %474 = vst [vmem:[%s195 + $0x38] sm:$0xf] %v442
        %475 = vst [vmem:[%s195 + $0x3c] sm:$0xf] %v443
        %v476 = vld [vmem:[%s2] sm:$0x1]
        %477 = vmatprep.subr.mxu0 0.0
        %478 = vmatpush1.xpose.msra.mxu0 %v393
        %479 = vmatprep.subr.mxu0 0.0
        %480 = vmatpush1.xpose.msra.mxu0 %v390
        %481 = vmatprep.subr.mxu0 0.0
        %482 = vmatpush1.xpose.msra.mxu0 %v385
        %483 = vmatprep.subr.mxu0 0.0
        %484 = vmatpush1.xpose.msra.mxu0 %v382
        %485 = vmatprep.subr.mxu0 0.0
        %486 = vmatpush1.xpose.msra.mxu0 %v377
        %487 = vmatprep.subr.mxu0 0.0
        %488 = vmatpush1.xpose.msra.mxu0 %v374
        %489 = vmatprep.subr.mxu0 0.0
        %490 = vmatpush1.xpose.msra.mxu0 %v369
        %491 = vmatprep.subr.mxu0 0.0
        %492 = vmatpush1.xpose.msra.mxu0 %v366
        %493 = vmatprep.subr.mxu0 0.0
        %494 = vmatpush1.xpose.msra.mxu0 %v361
        %495 = vmatprep.subr.mxu0 0.0
        %496 = vmatpush1.xpose.msra.mxu0 %v358
        %497 = vmatprep.subr.mxu0 0.0
        %498 = vmatpush1.xpose.msra.mxu0 %v353
        %499 = vmatprep.subr.mxu0 0.0
        %500 = vmatpush1.xpose.msra.mxu0 %v350
        %501 = vmatprep.subr.mxu0 0.0
        %502 = vmatpush1.xpose.msra.mxu0 %v345
        %503 = vmatprep.subr.mxu0 0.0
        %504 = vmatpush1.xpose.msra.mxu0 %v342
        %505 = vmatprep.subr.mxu0 0.0
        %506 = vmatpush1.xpose.msra.mxu0 %v337
        %507 = vmatprep.subr.mxu0 0.0
        %508 = vmatpush1.xpose.msra.mxu0 %v334
        %509 = vmatprep.subr.mxu0 0.0
        %510 = vmatpush2.xpose.msra.mxu0 0.0
        %511 = vmatprep.subr.mxu0 0.0
        %512 = vmatpush2.xpose.msra.mxu0 0.0
        %513 = vmatprep.subr.mxu0 0.0
        %514 = vmatpush2.xpose.msra.mxu0 0.0
        %515 = vmatprep.subr.mxu0 0.0
        %516 = vmatpush2.xpose.msra.mxu0 0.0
        %517 = vmatprep.subr.mxu0 0.0
        %518 = vmatpush2.xpose.msra.mxu0 0.0
        %519 = vmatprep.subr.mxu0 0.0
        %520 = vmatpush2.xpose.msra.mxu0 0.0
        %521 = vmatprep.subr.mxu0 0.0
        %522 = vmatpush2.xpose.msra.mxu0 0.0
        %523 = vmatprep.subr.mxu0 0.0
        %524 = vmatpush2.xpose.msra.mxu0 0.0
        %525 = vmatprep.subr.mxu0 0.0
        %526 = vmatpush2.xpose.msra.mxu0 0.0
        %527 = vmatprep.subr.mxu0 0.0
        %528 = vmatpush2.xpose.msra.mxu0 0.0
        %529 = vmatprep.subr.mxu0 0.0
        %530 = vmatpush2.xpose.msra.mxu0 0.0
        %531 = vmatprep.subr.mxu0 0.0
        %532 = vmatpush2.xpose.msra.mxu0 0.0
        %533 = vmatprep.subr.mxu0 0.0
        %534 = vmatpush2.xpose.msra.mxu0 0.0
        %535 = vmatprep.subr.mxu0 0.0
        %536 = vmatpush2.xpose.msra.mxu0 0.0
        %537 = vmatprep.subr.mxu0 0.0
        %538 = vmatpush2.xpose.msra.mxu0 0.0
        %539 = vmatprep.subr.mxu0 0.0
        %540 = vmatpush2.xpose.msra.mxu0 0.0
        %541 = vmatprep.mubr.f32.mxu0 0.0
        %542 = vmatmul.mubr.f32.gmra.mxu0 %v476
        %v543 = vpop.f32.mrf.mxu0
        %v544 = vadd.f32 0.0, %v543
        %v545 = vpop.f32.mrf.mxu0
        %546 = vdwg.mxu0
        %547 = vst [vmem:[%s201] sm:$0x1] %v544
        %s548 = sand.u32 %s98, 1
        %s549 = scalar_lea.sflag [#allocation3], %s548
        %s550 = sand.u32 %s98, 1
        %s551 = smul.addr %s550, 64
        %s552 = scalar_lea.vmem [#allocation2], %s551
        %s553 = sand.u32 %s124, 1
        %s554 = scalar_lea.sflag [#allocation5], %s553
        %s555 = sand.u32 %s124, 1
        %s556 = scalar_lea.vmem [#allocation4], %s555
        // Predicated region
        $region33: #{tpu_custom_call.1} parent=31 // pred_check
          %p557 = pneg %p108
        $region34: #{tpu_custom_call.1} parent=31 // pred_check_branch
          %559 = sbr.rel (%p557) target = $region36
        $region35: #{tpu_custom_call.1} parent=31 // pred_region
          %s560 = smul.u32 16, %s22
          %s562 = ssub.s32 1024, 1024
          %563 = vsyncadd %s549, %s562
          %s564 = smul.addr %s560, 64
          %s565 = scalar_lea.hbm %s3, %s564
          %s566 = sshll.u32 %s552, 4
          %s567 = int_to_ptr.vmem [resolvable:$true] %s566
          %572 = dma.vmem_to_hbm [thread:$0]  %s567, 1024, %s565, %s549, 64, 64, 4
        $region36: #{tpu_custom_call.1} parent=31 // pred_fallthru
          _
        // Predicated region
        $region37: #{tpu_custom_call.1} parent=31 // pred_check
          %p573 = pneg %p134
        $region38: #{tpu_custom_call.1} parent=31 // pred_check_branch
          %575 = sbr.rel (%p573) target = $region40
        $region39: #{tpu_custom_call.1} parent=31 // pred_region
          %s577 = ssub.s32 16, 16
          %578 = vsyncadd %s554, %s577
          %s579 = smul.addr %s22, 16
          %s580 = scalar_lea.hbm %s4, %s579
          %s582 = sshll.u32 %s556, 4
          %s583 = int_to_ptr.vmem [resolvable:$true] %s582
          %585 = dma.vmem_to_hbm [thread:$0]  %s583, 16, %s580, %s554
        $region40: #{tpu_custom_call.1} parent=31 // pred_fallthru
          _
      $region32: #{tpu_custom_call.1} parent=5 // pred_fallthru
        _
      %p586 = scmp.le.s32.totalorder 2, %s17
      // Predicated region
      $region41: #{tpu_custom_call.1} parent=5 // pred_check
        %p587 = pneg %p586
      $region42: #{tpu_custom_call.1} parent=5 // pred_check_branch
        %589 = sbr.rel (%p587) target = $region44
      $region43: #{tpu_custom_call.1} parent=5 // pred_region
        %s590 = ssub.s32 %s17, 2
        // Predicated region
        $region45: #{tpu_custom_call.1} parent=43 // pred_check
          %p591 = pneg %p114
        $region46: #{tpu_custom_call.1} parent=43 // pred_check_branch
          %593 = sbr.rel (%p591) target = $region48
        $region47: #{tpu_custom_call.1} parent=43 // pred_region
          %s594 = sand.u32 %s99, 1
          %s595 = scalar_lea.sflag [#allocation3], %s594
          %s596 = sand.u32 %s99, 1
          %s597 = smul.addr %s596, 64
          %s598 = scalar_lea.vmem [#allocation2], %s597
          %599 = dma.done %s595, 1024
        $region48: #{tpu_custom_call.1} parent=43 // pred_fallthru
          _
        // Predicated region
        $region49: #{tpu_custom_call.1} parent=43 // pred_check
          %p600 = pneg %p140
        $region50: #{tpu_custom_call.1} parent=43 // pred_check_branch
          %602 = sbr.rel (%p600) target = $region52
        $region51: #{tpu_custom_call.1} parent=43 // pred_region
          %s603 = sand.u32 %s125, 1
          %s604 = scalar_lea.sflag [#allocation5], %s603
          %s605 = sand.u32 %s125, 1
          %s606 = scalar_lea.vmem [#allocation4], %s605
          %607 = dma.done %s604, 16
        $region52: #{tpu_custom_call.1} parent=43 // pred_fallthru
          _
      $region44: #{tpu_custom_call.1} parent=5 // pred_fallthru
        _
    $region6: #{tpu_custom_call.1} parent=1 // loop_footer
      %s21 = sadd.s32 1, %s17
    $region7: #{tpu_custom_call.1} parent=1 // loop_footer_branch
      %16 = sbr.rel target = $region3
    $region8: #{tpu_custom_call.1} parent=1 // loop_exit
      _
    %608 = vsyncpa [#allocation3], 1
    %s609 = scalar_lea.sflag [#allocation3], 1
    %610 = vsyncpa %s609, 1
    %611 = vsyncpa [#allocation5], 1
    %s612 = scalar_lea.sflag [#allocation5], 1
    %613 = vsyncpa %s612, 1

</llo_original>
